<compile_context>
chip_gen: v5e
topology: v5e:2x2
jax: 0.10.0
libtpu: 0.0.40
codegen_flags: <defaults>
</compile_context>

<pallas_src>
import jax
import jax.numpy as jnp
from jax.experimental import pallas as pl
from jax.experimental.pallas import tpu as pltpu

# ---------------- small config consistent with simplevit ---------------------
BATCH = 2
IMG_SIZE = 16
PATCH_SIZE = 4
EMBED_DIM = 32
N_PATCHES = (IMG_SIZE // PATCH_SIZE) ** 2      # 16
SEQ = N_PATCHES + 1                            # 17 = cls token + patches


# ---------------- kernel ------------------------------------------------------
def _pos_embed_kernel(pos_ref, o_ref):
    # pos_ref: (1, T*E) lane-dense slab; o_ref: (Bblk, T*E).
    # One broadcast, one full-slab (mostly unmasked 128-lane) store.
    o_ref[...] = jnp.broadcast_to(pos_ref[...], o_ref.shape)


# ---------------- wrapper (module.forward equivalent) -------------------------
def positional_embedding_forward(x, pos_embed, *, batch_block=None):
    """Pallas equivalent of PositionalEmbedding.forward.

    `x` is only consulted for its static batch size (exactly like the PyTorch
    module, which only calls x.size(0)); its data never enters the kernel.

    batch_block: optional batch tile size for large B (keeps the kernel
    portable to v7x's smaller VMEM and lets both TensorCores share the
    writeback).  Default (None) uses a single un-gridded VMEM-resident block,
    which is optimal at small B.
    """
    B = x.shape[0]
    _, T, E = pos_embed.shape
    flat = pos_embed.reshape(1, T * E)            # free, row-major compatible
    itemsize = jnp.dtype(pos_embed.dtype).itemsize
    cost = pl.CostEstimate(
        flops=0,
        transcendentals=0,
        bytes_accessed=(1 + B) * T * E * itemsize,
    )

    if batch_block is None or batch_block >= B:
        # Single-block path: no grid, no pipeline bookkeeping.
        out_flat = pl.pallas_call(
            _pos_embed_kernel,
            out_shape=jax.ShapeDtypeStruct((B, T * E), pos_embed.dtype),
            in_specs=[pl.BlockSpec(memory_space=pltpu.MemorySpace.VMEM)],
            out_specs=pl.BlockSpec(memory_space=pltpu.MemorySpace.VMEM),
            cost_estimate=cost,
        )(flat)
    else:
        # Batch-tiled path for large B (v7x megacore / VMEM budget).
        tb = batch_block
        out_flat = pl.pallas_call(
            _pos_embed_kernel,
            out_shape=jax.ShapeDtypeStruct((B, T * E), pos_embed.dtype),
            grid=(pl.cdiv(B, tb),),
            in_specs=[pl.BlockSpec((1, T * E), lambda i: (0, 0))],
            out_specs=pl.BlockSpec((tb, T * E), lambda i: (i, 0)),
            compiler_params=pltpu.CompilerParams(
                dimension_semantics=("parallel",)
            ),
            cost_estimate=cost,
        )(flat)

    return out_flat.reshape(B, T, E)


if __name__ == "__main__":
    key = jax.random.PRNGKey(0)
    pkey, xkey = jax.random.split(key)

    # The PyTorch module initializes pos_embed to zeros; use deterministic
    # random values here so the broadcast is actually exercised/verifiable.
    pos_embed = (0.02 * jax.random.normal(pkey, (1, SEQ, EMBED_DIM))).astype(
        jnp.float32
    )
    # Token tensor the module receives in simplevit: (B, n_patches+1, E).
    # Only its batch size matters for this module's forward.
    x = jax.random.normal(xkey, (BATCH, SEQ, EMBED_DIM), dtype=jnp.float32)

    out = positional_embedding_forward(x, pos_embed)
    out = jax.block_until_ready(out)

    ref = jnp.broadcast_to(pos_embed, (BATCH, SEQ, EMBED_DIM))
    assert out.shape == (BATCH, SEQ, EMBED_DIM)
    assert out.dtype == jnp.float32
    assert bool(jnp.all(out == ref))
    print("KERNEL_OK")
</pallas_src>

<mosaic_0001>
module attributes {stable_mosaic.version = 11 : i64} {
  func.func @_pos_embed_kernel(%arg0: memref<1x544xf32, #tpu.memory_space<vmem>>, %arg1: memref<2x544xf32, #tpu.memory_space<vmem>>) attributes {dimension_semantics = [], scalar_prefetch = 0 : i64, scratch_operands = 0 : i64, tpu.core_type = #tpu.core_type<tc>} {
    %c0 = arith.constant 0 : index
    %c0_0 = arith.constant 0 : index
    %0 = vector.load %arg0[%c0, %c0_0] : memref<1x544xf32, #tpu.memory_space<vmem>>, vector<1x544xf32>
    %1 = vector.shape_cast %0 : vector<1x544xf32> to vector<1x544xf32>
    %2 = vector.broadcast %1 : vector<1x544xf32> to vector<2x544xf32>
    %c0_1 = arith.constant 0 : index
    %c0_2 = arith.constant 0 : index
    %3 = vector.load %arg1[%c0_1, %c0_2] : memref<2x544xf32, #tpu.memory_space<vmem>>, vector<2x544xf32>
    tpu.vector_store %arg1[%c0_1, %c0_2], %2 {strides = array<i32>} : memref<2x544xf32, #tpu.memory_space<vmem>>, vector<2x544xf32>,
    return
  }
}

</mosaic_0001>

<llo_original>
// kernel: tpu_custom_call.1
$region0: #{tpu_custom_call.1}
  #allocation0 [shape = 'u32[]', space=smem, size = 0x4, offset = 0x4, fixed_abs, tag = 'smem constant byte address 0x4 - core index']
  #allocation1 [shape = 'u32[72,128]{1,0:T(1,128)}', space=vmem, size = 0x9000, scoped, tag = 'internal scratch']
  %s0 = inlined_call_operand.hbm [shape: f32[1,544], index: 0, kind: input, shape index: {}]
  %s1 = inlined_call_operand.hbm [shape: f32[2,544], index: 1, kind: output, shape index: {}]
  %s2 = sld [smem:[#allocation0]]
  $region18: #{tpu_custom_call.1} parent=0
    _
  %s4 = ssub.s32 1, %s2
  %s5 = scalar_select 0, %s4, %s2
  $region1: #{tpu_custom_call.1} parent=0
    #allocation2 [shape = 'u8[2560]{0}', space=vmem, size = 0xc00, scoped, tag = 'input window, operand 0, single buffered']
    #allocation3 [shape = 's32[1]{0}', space=sflag, size = 0x4, scoped, tag = 'scoped memory for tpu_custom_call.1']
    #allocation4 [shape = 's32[1]{0}', space=sflag, size = 0x4, scoped, tag = 'scoped memory for tpu_custom_call.1']
    #allocation5 [shape = 'u8[5120]{0}', space=vmem, size = 0x1400, scoped, tag = 'output window, operand 0, single buffered']
    %6 = vsyncpa [#allocation3], 0
    %7 = vsyncpa [#allocation4], 0
    // Predicated region
    $region2: #{tpu_custom_call.1} parent=1 // pred_check
      _
    $region3: #{tpu_custom_call.1} parent=1 // pred_check_branch
      %9 = sbr.rel (0) target = $region5
    $region4: #{tpu_custom_call.1} parent=1 // pred_region
      %11 = vsyncadd [#allocation3], 0
      %s13 = sshll.u32 %s0, 4
      %s14 = int_to_ptr.hbm [resolvable:$true] %s13
      %s15 = sshll.u32 [#allocation2], 4
      %s16 = int_to_ptr.vmem [resolvable:$true] %s15
      %18 = dma.hbm_to_vmem [thread:$0]  %s14, 80, %s16, [#allocation3]
    $region5: #{tpu_custom_call.1} parent=1 // pred_fallthru
      _
    // Predicated region
    $region6: #{tpu_custom_call.1} parent=1 // pred_check
      _
    $region7: #{tpu_custom_call.1} parent=1 // pred_check_branch
      %20 = sbr.rel (0) target = $region9
    $region8: #{tpu_custom_call.1} parent=1 // pred_region
      %22 = dma.done [#allocation3], 80
    $region9: #{tpu_custom_call.1} parent=1 // pred_fallthru
      _
    %v23 = vld [vmem:[#allocation2] sm:$0x1f]
    %v25 = vperm.slane %v23, 0
    %v26 = vperm.slane %v23, 1
    %v27 = vperm.slane %v23, 2
    %v28 = vperm.slane %v23, 3
    %v29 = vperm.slane %v23, 4
    %v31 = vrot.slane %v26, 6
    %v32 = vrot.slane %v27, 4
    %v33 = vrot.slane %v28, 2
    %vm34 = vcmask 1041408
    %v35 = vsel %vm34, %v25, %v31
    %vm36 = vcmask 1045508
    %v37 = vsel %vm36, %v32, %v33
    %vm38 = vcmask 1043456
    %v39 = vsel %vm38, %v35, %v37
    %41 = vst [vmem:[#allocation5] sm:$0xff] %v39
    %vm42 = vcmask 254976
    %43 = vst.msk [vmem:[#allocation5 + $0x8] sm:$0x3] %vm42, %v29
    // Predicated region
    $region10: #{tpu_custom_call.1} parent=1 // pred_check
      _
    $region11: #{tpu_custom_call.1} parent=1 // pred_check_branch
      %45 = sbr.rel (0) target = $region13
    $region12: #{tpu_custom_call.1} parent=1 // pred_region
      %47 = vsyncadd [#allocation4], 0
      %s49 = sshll.u32 [#allocation5], 4
      %s50 = int_to_ptr.vmem [resolvable:$true] %s49
      %s51 = sshll.u32 %s1, 4
      %s52 = int_to_ptr.hbm [resolvable:$true] %s51
      %54 = dma.vmem_to_hbm [thread:$0]  %s50, 160, %s52, [#allocation4]
    $region13: #{tpu_custom_call.1} parent=1 // pred_fallthru
      _
    // Predicated region
    $region14: #{tpu_custom_call.1} parent=1 // pred_check
      _
    $region15: #{tpu_custom_call.1} parent=1 // pred_check_branch
      %56 = sbr.rel (0) target = $region17
    $region16: #{tpu_custom_call.1} parent=1 // pred_region
      %58 = dma.done [#allocation4], 160
    $region17: #{tpu_custom_call.1} parent=1 // pred_fallthru
      _
    %59 = vsyncpa [#allocation3], 1
    %60 = vsyncpa [#allocation4], 1

</llo_original>
